<compile_context>
chip_gen: v5e
topology: v5e:2x2
jax: 0.10.0
libtpu: 0.0.40
codegen_flags: <defaults>
</compile_context>

<pallas_src>
import functools

import jax
import jax.numpy as jnp
from jax.experimental import pallas as pl
from jax.experimental.pallas import tpu as pltpu


def _round_up(x, m):
    return (x + m - 1) // m * m


# ----------------------------------------------------------------------------
# Fused TCN kernel (all blocks, Bt batch elements per grid step)
# ----------------------------------------------------------------------------
def _tcn_body(x_ref, w_ref, b_ref, o_ref, hbuf, *, dilations, ksize, t_len,
              pad_a, bt):
    """Whole TCN stack for `bt` batch elements, activations resident in VMEM.

    x_ref : (bt, Cp, Tp)            input activations (f32)
    w_ref : (2L, K, Cp, Cp)         per-tap conv weights (f32 or bf16)
    b_ref : (2L, Cp, 1)             conv biases (f32)
    o_ref : (bt, Cp, Tp)            TCN output
    hbuf  : (bt, Cp, pad_a + Tp)    scratch; columns [:pad_a] stay zero
                                    (lane-aligned causal left pad)
    """
    cp = hbuf.shape[1]
    mm = w_ref.dtype
    n_layers = len(dilations)

    # Zero only the causal pad region (activation region is overwritten below).
    hbuf[:, :, :pad_a] = jnp.zeros((bt, cp, pad_a), jnp.float32)
    hbuf[:, :, pad_a:] = x_ref[...].astype(jnp.float32)

    for b in range(bt):                                 # batch elems this step
        h = None
        for i, d in enumerate(dilations):               # TemporalBlocks
            res = hbuf[b, :, pad_a:]                    # block input (residual)
            for j in range(2):                          # conv1, conv2
                idx = 2 * i + j
                acc = None
                for k in range(ksize):                  # K partial matmuls
                    # torch Conv1d + Chomp1d: w[:,:,k] pairs with x[t-(K-1-k)*d]
                    off = (ksize - 1 - k) * d
                    tap = hbuf[b, :, pad_a - off: pad_a - off + t_len]
                    p = jnp.dot(w_ref[idx, k], tap.astype(mm),
                                preferred_element_type=jnp.float32)
                    acc = p if acc is None else acc + p
                h = jnp.maximum(acc + b_ref[idx], 0.0)  # bias + ReLU (dropout=id)
                if j == 1:
                    h = jnp.maximum(h + res, 0.0)       # residual + block ReLU
                # Last block/conv output is consumed directly -> skip the store.
                if not (j == 1 and i == n_layers - 1):
                    hbuf[b, :, pad_a:] = h
        o_ref[b] = h.astype(o_ref.dtype)


def tcn_forward(x, w_all, b_all, dilations, ksize, bt, out_dtype):
    """x: (B, Cp, Tp); w_all: (2L, K, Cp, Cp); b_all: (2L, Cp, 1)."""
    B, Cp, Tp = x.shape
    assert B % bt == 0
    pad_l = (ksize - 1) * max(dilations)
    pad_a = _round_up(max(pad_l, 1), 128)   # lane-aligned causal pad
    kernel = functools.partial(_tcn_body, dilations=tuple(dilations),
                               ksize=ksize, t_len=Tp, pad_a=pad_a, bt=bt)
    return pl.pallas_call(
        kernel,
        out_shape=jax.ShapeDtypeStruct((B, Cp, Tp), out_dtype),
        grid=(B // bt,),
        in_specs=[
            pl.BlockSpec((bt, Cp, Tp), lambda g: (g, 0, 0)),
            pl.BlockSpec(w_all.shape, lambda g: (0, 0, 0, 0)),   # VMEM-resident
            pl.BlockSpec(b_all.shape, lambda g: (0, 0, 0)),      # VMEM-resident
        ],
        out_specs=pl.BlockSpec((bt, Cp, Tp), lambda g: (g, 0, 0)),
        scratch_shapes=[pltpu.VMEM((bt, Cp, pad_a + Tp), jnp.float32)],
        compiler_params=pltpu.CompilerParams(
            dimension_semantics=("parallel",)),
    )(x, w_all, b_all)


# ----------------------------------------------------------------------------
# Regression head: Linear(F,512) -> ReLU -> (Dropout=id) -> Linear(512,1)
# ----------------------------------------------------------------------------
def _head_body(x_ref, w1_ref, b1_ref, w2t_ref, b2_ref, o_ref, acc_ref):
    k = pl.program_id(0)

    @pl.when(k == 0)
    def _():
        acc_ref[...] = jnp.zeros_like(acc_ref)

    acc_ref[...] += jnp.dot(x_ref[...].astype(w1_ref.dtype), w1_ref[...],
                            preferred_element_type=jnp.float32)

    @pl.when(k == pl.num_programs(0) - 1)
    def _():
        h = jnp.maximum(acc_ref[...] + b1_ref[...], 0.0)
        # Second GEMM (H -> 1) on the VPU/XLU: avoids an N=1 MXU pass.
        out = jnp.sum(h * w2t_ref[...], axis=1, keepdims=True) + b2_ref[...]
        o_ref[...] = out.astype(o_ref.dtype)


def regression_head(x, w1, b1, w2, b2, mm_dtype=jnp.float32, tile_f=None):
    """x: (B, F); w1: (F, H); b1: (1, H); w2: (H, 1); b2: (1, 1) -> (B, 1)."""
    B, F = x.shape
    H = w1.shape[1]
    if tile_f is None:
        n_steps = max(2, pl.cdiv(F, 2048))          # >= 2 steps, <= ~2048/tile
        tile_f = _round_up(pl.cdiv(F, n_steps), 128)
    f_pad = _round_up(F, tile_f)
    if f_pad != F:                                   # zero rows/cols: exact math
        x = jnp.pad(x, ((0, 0), (0, f_pad - F)))
        w1 = jnp.pad(w1, ((0, f_pad - F), (0, 0)))
    x = x.astype(mm_dtype)
    w1 = w1.astype(mm_dtype)
    w2t = w2.reshape(1, H)
    b1 = b1.reshape(1, H)
    b2 = b2.reshape(1, 1)
    return pl.pallas_call(
        _head_body,
        out_shape=jax.ShapeDtypeStruct((B, 1), jnp.float32),
        grid=(f_pad // tile_f,),
        in_specs=[
            pl.BlockSpec((B, tile_f), lambda k: (0, k)),
            pl.BlockSpec((tile_f, H), lambda k: (k, 0)),
            pl.BlockSpec((1, H), lambda k: (0, 0)),
            pl.BlockSpec((1, H), lambda k: (0, 0)),
            pl.BlockSpec((1, 1), lambda k: (0, 0)),
        ],
        out_specs=pl.BlockSpec((B, 1), lambda k: (0, 0)),
        scratch_shapes=[pltpu.VMEM((B, H), jnp.float32)],
        compiler_params=pltpu.CompilerParams(
            dimension_semantics=("arbitrary",)),
    )(x, w1, b1, w2t, b2)


# ----------------------------------------------------------------------------
# Parameter setup (deterministic, synthetic)
# ----------------------------------------------------------------------------
def _weight_norm_effective(v, g):
    """PyTorch weight_norm(dim=0): w = g * v / ||v||_(1,2) per output channel."""
    norm = jnp.sqrt(jnp.sum(v * v, axis=(1, 2), keepdims=True))
    return g.reshape(-1, 1, 1) * v / norm


def init_params(key, num_mels, mel_len, num_channels, kernel_size, hidden=512):
    # Module defaults (100 == 100) -> no TemporalBlock.downsample 1x1 convs.
    assert len(set(num_channels)) == 1 and num_mels == num_channels[0], (
        "fused kernel assumes uniform channels (matches module defaults)")
    params = {"blocks": []}
    in_ch = num_mels
    for out_ch in num_channels:
        key, k1, k2, k3, k4 = jax.random.split(key, 5)
        v1 = 0.1 * jax.random.normal(k1, (out_ch, in_ch, kernel_size), jnp.float32)
        v2 = 0.1 * jax.random.normal(k2, (out_ch, out_ch, kernel_size), jnp.float32)
        params["blocks"].append({
            "w1": _weight_norm_effective(v1, jnp.ones((out_ch,), jnp.float32)),
            "b1": 0.01 * jax.random.normal(k3, (out_ch,), jnp.float32),
            "w2": _weight_norm_effective(v2, jnp.ones((out_ch,), jnp.float32)),
            "b2": 0.01 * jax.random.normal(k4, (out_ch,), jnp.float32),
        })
        in_ch = out_ch
    F = num_channels[-1] * mel_len
    key, k1, k2, k3, k4 = jax.random.split(key, 5)
    params["head_w1"] = 0.05 * jax.random.normal(k1, (F, hidden), jnp.float32)
    params["head_b1"] = 0.01 * jax.random.normal(k2, (1, hidden), jnp.float32)
    params["head_w2"] = 0.05 * jax.random.normal(k3, (hidden, 1), jnp.float32)
    params["head_b2"] = 0.01 * jax.random.normal(k4, (1, 1), jnp.float32)
    return params


def _stack_tcn_weights(blocks, K, c_pad, mm_dtype):
    """(C_out, C_in, K) -> (2L, K, Cp, Cp) per-tap weights, zero-padded channels;
    biases -> (2L, Cp, 1)."""
    ws, bs = [], []
    for blk in blocks:
        for w, b in ((blk["w1"], blk["b1"]), (blk["w2"], blk["b2"])):
            c_out, c_in, _ = w.shape
            wp = jnp.zeros((K, c_pad, c_pad), jnp.float32)
            wp = wp.at[:, :c_out, :c_in].set(jnp.transpose(w, (2, 0, 1)))
            ws.append(wp)
            bp = jnp.zeros((c_pad, 1), jnp.float32)
            bp = bp.at[:c_out, 0].set(b)
            bs.append(bp)
    return jnp.stack(ws).astype(mm_dtype), jnp.stack(bs)


def _pick_bt(batch, bt):
    """Largest divisor of B (<=8) that still leaves >=2 grid steps (v7x 2-TC)."""
    if bt is not None:
        return bt
    best = 1
    for cand in range(1, min(batch, 8) + 1):
        if batch % cand == 0 and batch // cand >= 2:
            best = cand
    return best


# ----------------------------------------------------------------------------
# Full forward (matches TemporalConvNetRegression.forward, eval mode)
# ----------------------------------------------------------------------------
def temporal_conv_net_regression(x, params, kernel_size,
                                 mm_dtype=jnp.float32, bt=None, tile_f=None):
    B = x.shape[0]
    h = jnp.squeeze(x, axis=1)                       # (B, num_mels, mel_len)
    C, T = h.shape[1], h.shape[2]

    # Align channels to the sublane packing (8 f32 / 16 bf16) and time to lanes.
    c_pad = _round_up(C, 8 if mm_dtype == jnp.float32 else 16)
    t_pad = _round_up(T, 128)
    h = jnp.pad(h, ((0, 0), (0, c_pad - C), (0, t_pad - T)))

    w_all, b_all = _stack_tcn_weights(params["blocks"], kernel_size, c_pad,
                                      mm_dtype)
    dilations = tuple(2 ** i for i in range(len(params["blocks"])))
    bt = _pick_bt(B, bt)

    h = tcn_forward(h, w_all, b_all, dilations, kernel_size, bt, mm_dtype)
    h = h[:, :C, :T]                                 # drop channel/time padding
    flat = h.reshape(B, -1)                          # matches torch reshape(B,-1)
    out = regression_head(flat, params["head_w1"], params["head_b1"],
                          params["head_w2"], params["head_b2"],
                          mm_dtype=mm_dtype, tile_f=tile_f)
    return (None, out)


# ----------------------------------------------------------------------------
# Pure-JAX reference (same math / same operand quantization) for correctness
# ----------------------------------------------------------------------------
def _ref_forward(x, params, kernel_size, mm_dtype=jnp.float32):
    h = jnp.squeeze(x, axis=1)
    T = h.shape[-1]
    for i, blk in enumerate(params["blocks"]):
        d = 2 ** i
        res = h
        for w, b, last in ((blk["w1"], blk["b1"], False),
                           (blk["w2"], blk["b2"], True)):
            pad = (kernel_size - 1) * d
            hp = jnp.pad(h, ((0, 0), (0, 0), (pad, 0)))
            acc = None
            for k in range(kernel_size):
                p = jnp.einsum("oc,bct->bot", w[:, :, k].astype(mm_dtype),
                               hp[:, :, k * d:k * d + T].astype(mm_dtype),
                               preferred_element_type=jnp.float32)
                acc = p if acc is None else acc + p
            h = jnp.maximum(acc + b[None, :, None], 0.0)
            if last:
                h = jnp.maximum(h + res, 0.0)
    flat = h.reshape(h.shape[0], -1)
    hid = jnp.maximum(
        jnp.dot(flat.astype(mm_dtype), params["head_w1"].astype(mm_dtype),
                preferred_element_type=jnp.float32) + params["head_b1"], 0.0)
    return jnp.dot(hid, params["head_w2"]) + params["head_b2"]


# ----------------------------------------------------------------------------
if __name__ == "__main__":
    # Small shapes consistent with the module (num_mels == num_channels entries,
    # mirroring the 100/100 default so no 1x1 downsample convs exist).
    B, NUM_MELS, MEL_LEN = 2, 8, 128
    NUM_CHANNELS = [8, 8, 8, 8]
    KSIZE = 2

    key = jax.random.PRNGKey(0)
    key, kx = jax.random.split(key)
    x = jax.random.normal(kx, (B, 1, NUM_MELS, MEL_LEN), jnp.float32)
    params = init_params(key, NUM_MELS, MEL_LEN, NUM_CHANNELS, KSIZE)

    # f32 path: strict parity with the f32 reference.
    none_out, out = temporal_conv_net_regression(x, params, KSIZE)
    out = jax.block_until_ready(out)
    assert none_out is None
    assert out.shape == (B, 1)
    ref = _ref_forward(x, params, KSIZE)
    assert jnp.allclose(out, ref, atol=1e-4, rtol=1e-4)

    # bf16 matmul-operand path (v6e/v7x MXU): compare against a reference that
    # quantizes the same operands, so only accumulation-order noise remains.
    _, out_bf16 = temporal_conv_net_regression(x, params, KSIZE,
                                               mm_dtype=jnp.bfloat16)
    out_bf16 = jax.block_until_ready(out_bf16)
    ref_bf16 = _ref_forward(x, params, KSIZE, mm_dtype=jnp.bfloat16)
    assert jnp.allclose(out_bf16, ref_bf16, atol=5e-3, rtol=5e-3)

    print("KERNEL_OK")
</pallas_src>

<mosaic_0001>
module attributes {stable_mosaic.version = 11 : i64} {
  func.func @_tcn_body(%arg0: i32, %arg1: memref<1x8x128xf32, #tpu.memory_space<vmem>>, %arg2: memref<8x2x8x8xf32, #tpu.memory_space<vmem>>, %arg3: memref<8x8x1xf32, #tpu.memory_space<vmem>>, %arg4: memref<1x8x128xf32, #tpu.memory_space<vmem>>, %arg5: memref<1x8x256xf32, #tpu.memory_space<vmem>>) attributes {dimension_semantics = [#tpu.dimension_semantics<parallel>], iteration_bounds = array<i64: 2>, scalar_prefetch = 0 : i64, scratch_operands = 1 : i64, tpu.core_type = #tpu.core_type<tc>, window_params = [{transform_indices = @transform_0, window_bounds = array<i64: 1, 8, 128>}, {pipeline_mode = #tpu.pipeline_mode<synchronous>, transform_indices = @transform_1, window_bounds = array<i64: 8, 2, 8, 8>}, {pipeline_mode = #tpu.pipeline_mode<synchronous>, transform_indices = @transform_2, window_bounds = array<i64: 8, 8, 1>}, {transform_indices = @transform_3, window_bounds = array<i64: 1, 8, 128>}]} {
    %cst = arith.constant 0.000000e+00 : f32
    %0 = vector.broadcast %cst : f32 to vector<1x8x128xf32>
    %c0 = arith.constant 0 : index
    %c0_0 = arith.constant 0 : index
    %c0_1 = arith.constant 0 : index
    %1 = vector.load %arg5[%c0, %c0_0, %c0_1] : memref<1x8x256xf32, #tpu.memory_space<vmem>>, vector<1x8x128xf32>
    tpu.vector_store %arg5[%c0, %c0_0, %c0_1], %0 {strides = array<i32>} : memref<1x8x256xf32, #tpu.memory_space<vmem>>, vector<1x8x128xf32>,
    %c0_2 = arith.constant 0 : index
    %c0_3 = arith.constant 0 : index
    %c0_4 = arith.constant 0 : index
    %2 = vector.load %arg1[%c0_2, %c0_3, %c0_4] : memref<1x8x128xf32, #tpu.memory_space<vmem>>, vector<1x8x128xf32>
    %c0_5 = arith.constant 0 : index
    %c0_6 = arith.constant 0 : index
    %c128 = arith.constant 128 : index
    %3 = vector.load %arg5[%c0_5, %c0_6, %c128] : memref<1x8x256xf32, #tpu.memory_space<vmem>>, vector<1x8x128xf32>
    tpu.vector_store %arg5[%c0_5, %c0_6, %c128], %2 {strides = array<i32>} : memref<1x8x256xf32, #tpu.memory_space<vmem>>, vector<1x8x128xf32>,
    %c0_7 = arith.constant 0 : index
    %c0_8 = arith.constant 0 : index
    %c128_9 = arith.constant 128 : index
    %4 = vector.load %arg5[%c0_7, %c0_8, %c128_9] : memref<1x8x256xf32, #tpu.memory_space<vmem>>, vector<1x8x128xf32>
    %5 = vector.shape_cast %4 : vector<1x8x128xf32> to vector<8x128xf32>
    %c0_10 = arith.constant 0 : index
    %c0_11 = arith.constant 0 : index
    %c127 = arith.constant 127 : index
    %6 = vector.load %arg5[%c0_10, %c0_11, %c127] : memref<1x8x256xf32, #tpu.memory_space<vmem>>, vector<1x8x128xf32>
    %7 = vector.shape_cast %6 : vector<1x8x128xf32> to vector<8x128xf32>
    %c0_12 = arith.constant 0 : index
    %c0_13 = arith.constant 0 : index
    %c0_14 = arith.constant 0 : index
    %c0_15 = arith.constant 0 : index
    %8 = vector.load %arg2[%c0_12, %c0_13, %c0_14, %c0_15] : memref<8x2x8x8xf32, #tpu.memory_space<vmem>>, vector<1x1x8x8xf32>
    %9 = vector.shape_cast %8 : vector<1x1x8x8xf32> to vector<8x8xf32>
    %cst_16 = arith.constant dense<0.000000e+00> : vector<8x128xf32>
    %10 = tpu.matmul %9, %7, %cst_16 {dimension_numbers = #tpu.dot_dimension_numbers<[1], [0], [0], [1], [0, 0, 1, 1], [], []>} : vector<8x8xf32>, vector<8x128xf32>, vector<8x128xf32> -> vector<8x128xf32>
    %c0_17 = arith.constant 0 : index
    %c0_18 = arith.constant 0 : index
    %c128_19 = arith.constant 128 : index
    %11 = vector.load %arg5[%c0_17, %c0_18, %c128_19] : memref<1x8x256xf32, #tpu.memory_space<vmem>>, vector<1x8x128xf32>
    %12 = vector.shape_cast %11 : vector<1x8x128xf32> to vector<8x128xf32>
    %c0_20 = arith.constant 0 : index
    %c1 = arith.constant 1 : index
    %c0_21 = arith.constant 0 : index
    %c0_22 = arith.constant 0 : index
    %13 = vector.load %arg2[%c0_20, %c1, %c0_21, %c0_22] : memref<8x2x8x8xf32, #tpu.memory_space<vmem>>, vector<1x1x8x8xf32>
    %14 = vector.shape_cast %13 : vector<1x1x8x8xf32> to vector<8x8xf32>
    %cst_23 = arith.constant dense<0.000000e+00> : vector<8x128xf32>
    %15 = tpu.matmul %14, %12, %cst_23 {dimension_numbers = #tpu.dot_dimension_numbers<[1], [0], [0], [1], [0, 0, 1, 1], [], []>} : vector<8x8xf32>, vector<8x128xf32>, vector<8x128xf32> -> vector<8x128xf32>
    %16 = arith.addf %10, %15 : vector<8x128xf32>
    %c0_24 = arith.constant 0 : index
    %c0_25 = arith.constant 0 : index
    %c0_26 = arith.constant 0 : index
    %17 = vector.load %arg3[%c0_24, %c0_25, %c0_26] : memref<8x8x1xf32, #tpu.memory_space<vmem>>, vector<1x8x1xf32>
    %18 = vector.shape_cast %17 : vector<1x8x1xf32> to vector<8x1xf32>
    %19 = vector.broadcast %18 : vector<8x1xf32> to vector<8x128xf32>
    %20 = arith.addf %16, %19 : vector<8x128xf32>
    %cst_27 = arith.constant 0.000000e+00 : f32
    %21 = vector.broadcast %cst_27 : f32 to vector<8x128xf32>
    %22 = arith.maximumf %20, %21 : vector<8x128xf32>
    %c0_28 = arith.constant 0 : index
    %c0_29 = arith.constant 0 : index
    %c128_30 = arith.constant 128 : index
    %23 = vector.load %arg5[%c0_28, %c0_29, %c128_30] : memref<1x8x256xf32, #tpu.memory_space<vmem>>, vector<1x8x128xf32>
    %24 = vector.shape_cast %23 : vector<1x8x128xf32> to vector<8x128xf32>
    %25 = vector.shape_cast %22 : vector<8x128xf32> to vector<1x8x128xf32>
    tpu.vector_store %arg5[%c0_28, %c0_29, %c128_30], %25 {strides = array<i32>} : memref<1x8x256xf32, #tpu.memory_space<vmem>>, vector<1x8x128xf32>,
    %c0_31 = arith.constant 0 : index
    %c0_32 = arith.constant 0 : index
    %c127_33 = arith.constant 127 : index
    %26 = vector.load %arg5[%c0_31, %c0_32, %c127_33] : memref<1x8x256xf32, #tpu.memory_space<vmem>>, vector<1x8x128xf32>
    %27 = vector.shape_cast %26 : vector<1x8x128xf32> to vector<8x128xf32>
    %c1_34 = arith.constant 1 : index
    %c0_35 = arith.constant 0 : index
    %c0_36 = arith.constant 0 : index
    %c0_37 = arith.constant 0 : index
    %28 = vector.load %arg2[%c1_34, %c0_35, %c0_36, %c0_37] : memref<8x2x8x8xf32, #tpu.memory_space<vmem>>, vector<1x1x8x8xf32>
    %29 = vector.shape_cast %28 : vector<1x1x8x8xf32> to vector<8x8xf32>
    %cst_38 = arith.constant dense<0.000000e+00> : vector<8x128xf32>
    %30 = tpu.matmul %29, %27, %cst_38 {dimension_numbers = #tpu.dot_dimension_numbers<[1], [0], [0], [1], [0, 0, 1, 1], [], []>} : vector<8x8xf32>, vector<8x128xf32>, vector<8x128xf32> -> vector<8x128xf32>
    %c0_39 = arith.constant 0 : index
    %c0_40 = arith.constant 0 : index
    %c128_41 = arith.constant 128 : index
    %31 = vector.load %arg5[%c0_39, %c0_40, %c128_41] : memref<1x8x256xf32, #tpu.memory_space<vmem>>, vector<1x8x128xf32>
    %32 = vector.shape_cast %31 : vector<1x8x128xf32> to vector<8x128xf32>
    %c1_42 = arith.constant 1 : index
    %c1_43 = arith.constant 1 : index
    %c0_44 = arith.constant 0 : index
    %c0_45 = arith.constant 0 : index
    %33 = vector.load %arg2[%c1_42, %c1_43, %c0_44, %c0_45] : memref<8x2x8x8xf32, #tpu.memory_space<vmem>>, vector<1x1x8x8xf32>
    %34 = vector.shape_cast %33 : vector<1x1x8x8xf32> to vector<8x8xf32>
    %cst_46 = arith.constant dense<0.000000e+00> : vector<8x128xf32>
    %35 = tpu.matmul %34, %32, %cst_46 {dimension_numbers = #tpu.dot_dimension_numbers<[1], [0], [0], [1], [0, 0, 1, 1], [], []>} : vector<8x8xf32>, vector<8x128xf32>, vector<8x128xf32> -> vector<8x128xf32>
    %36 = arith.addf %30, %35 : vector<8x128xf32>
    %c1_47 = arith.constant 1 : index
    %c0_48 = arith.constant 0 : index
    %c0_49 = arith.constant 0 : index
    %37 = vector.load %arg3[%c1_47, %c0_48, %c0_49] : memref<8x8x1xf32, #tpu.memory_space<vmem>>, vector<1x8x1xf32>
    %38 = vector.shape_cast %37 : vector<1x8x1xf32> to vector<8x1xf32>
    %39 = vector.broadcast %38 : vector<8x1xf32> to vector<8x128xf32>
    %40 = arith.addf %36, %39 : vector<8x128xf32>
    %cst_50 = arith.constant 0.000000e+00 : f32
    %41 = vector.broadcast %cst_50 : f32 to vector<8x128xf32>
    %42 = arith.maximumf %40, %41 : vector<8x128xf32>
    %43 = arith.addf %42, %5 : vector<8x128xf32>
    %cst_51 = arith.constant 0.000000e+00 : f32
    %44 = vector.broadcast %cst_51 : f32 to vector<8x128xf32>
    %45 = arith.maximumf %43, %44 : vector<8x128xf32>
    %c0_52 = arith.constant 0 : index
    %c0_53 = arith.constant 0 : index
    %c128_54 = arith.constant 128 : index
    %46 = vector.load %arg5[%c0_52, %c0_53, %c128_54] : memref<1x8x256xf32, #tpu.memory_space<vmem>>, vector<1x8x128xf32>
    %47 = vector.shape_cast %46 : vector<1x8x128xf32> to vector<8x128xf32>
    %48 = vector.shape_cast %45 : vector<8x128xf32> to vector<1x8x128xf32>
    tpu.vector_store %arg5[%c0_52, %c0_53, %c128_54], %48 {strides = array<i32>} : memref<1x8x256xf32, #tpu.memory_space<vmem>>, vector<1x8x128xf32>,
    %c0_55 = arith.constant 0 : index
    %c0_56 = arith.constant 0 : index
    %c128_57 = arith.constant 128 : index
    %49 = vector.load %arg5[%c0_55, %c0_56, %c128_57] : memref<1x8x256xf32, #tpu.memory_space<vmem>>, vector<1x8x128xf32>
    %50 = vector.shape_cast %49 : vector<1x8x128xf32> to vector<8x128xf32>
    %c0_58 = arith.constant 0 : index
    %c0_59 = arith.constant 0 : index
    %c126 = arith.constant 126 : index
    %51 = vector.load %arg5[%c0_58, %c0_59, %c126] : memref<1x8x256xf32, #tpu.memory_space<vmem>>, vector<1x8x128xf32>
    %52 = vector.shape_cast %51 : vector<1x8x128xf32> to vector<8x128xf32>
    %c2 = arith.constant 2 : index
    %c0_60 = arith.constant 0 : index
    %c0_61 = arith.constant 0 : index
    %c0_62 = arith.constant 0 : index
    %53 = vector.load %arg2[%c2, %c0_60, %c0_61, %c0_62] : memref<8x2x8x8xf32, #tpu.memory_space<vmem>>, vector<1x1x8x8xf32>
    %54 = vector.shape_cast %53 : vector<1x1x8x8xf32> to vector<8x8xf32>
    %cst_63 = arith.constant dense<0.000000e+00> : vector<8x128xf32>
    %55 = tpu.matmul %54, %52, %cst_63 {dimension_numbers = #tpu.dot_dimension_numbers<[1], [0], [0], [1], [0, 0, 1, 1], [], []>} : vector<8x8xf32>, vector<8x128xf32>, vector<8x128xf32> -> vector<8x128xf32>
    %c0_64 = arith.constant 0 : index
    %c0_65 = arith.constant 0 : index
    %c128_66 = arith.constant 128 : index
    %56 = vector.load %arg5[%c0_64, %c0_65, %c128_66] : memref<1x8x256xf32, #tpu.memory_space<vmem>>, vector<1x8x128xf32>
    %57 = vector.shape_cast %56 : vector<1x8x128xf32> to vector<8x128xf32>
    %c2_67 = arith.constant 2 : index
    %c1_68 = arith.constant 1 : index
    %c0_69 = arith.constant 0 : index
    %c0_70 = arith.constant 0 : index
    %58 = vector.load %arg2[%c2_67, %c1_68, %c0_69, %c0_70] : memref<8x2x8x8xf32, #tpu.memory_space<vmem>>, vector<1x1x8x8xf32>
    %59 = vector.shape_cast %58 : vector<1x1x8x8xf32> to vector<8x8xf32>
    %cst_71 = arith.constant dense<0.000000e+00> : vector<8x128xf32>
    %60 = tpu.matmul %59, %57, %cst_71 {dimension_numbers = #tpu.dot_dimension_numbers<[1], [0], [0], [1], [0, 0, 1, 1], [], []>} : vector<8x8xf32>, vector<8x128xf32>, vector<8x128xf32> -> vector<8x128xf32>
    %61 = arith.addf %55, %60 : vector<8x128xf32>
    %c2_72 = arith.constant 2 : index
    %c0_73 = arith.constant 0 : index
    %c0_74 = arith.constant 0 : index
    %62 = vector.load %arg3[%c2_72, %c0_73, %c0_74] : memref<8x8x1xf32, #tpu.memory_space<vmem>>, vector<1x8x1xf32>
    %63 = vector.shape_cast %62 : vector<1x8x1xf32> to vector<8x1xf32>
    %64 = vector.broadcast %63 : vector<8x1xf32> to vector<8x128xf32>
    %65 = arith.addf %61, %64 : vector<8x128xf32>
    %cst_75 = arith.constant 0.000000e+00 : f32
    %66 = vector.broadcast %cst_75 : f32 to vector<8x128xf32>
    %67 = arith.maximumf %65, %66 : vector<8x128xf32>
    %c0_76 = arith.constant 0 : index
    %c0_77 = arith.constant 0 : index
    %c128_78 = arith.constant 128 : index
    %68 = vector.load %arg5[%c0_76, %c0_77, %c128_78] : memref<1x8x256xf32, #tpu.memory_space<vmem>>, vector<1x8x128xf32>
    %69 = vector.shape_cast %68 : vector<1x8x128xf32> to vector<8x128xf32>
    %70 = vector.shape_cast %67 : vector<8x128xf32> to vector<1x8x128xf32>
    tpu.vector_store %arg5[%c0_76, %c0_77, %c128_78], %70 {strides = array<i32>} : memref<1x8x256xf32, #tpu.memory_space<vmem>>, vector<1x8x128xf32>,
    %c0_79 = arith.constant 0 : index
    %c0_80 = arith.constant 0 : index
    %c126_81 = arith.constant 126 : index
    %71 = vector.load %arg5[%c0_79, %c0_80, %c126_81] : memref<1x8x256xf32, #tpu.memory_space<vmem>>, vector<1x8x128xf32>
    %72 = vector.shape_cast %71 : vector<1x8x128xf32> to vector<8x128xf32>
    %c3 = arith.constant 3 : index
    %c0_82 = arith.constant 0 : index
    %c0_83 = arith.constant 0 : index
    %c0_84 = arith.constant 0 : index
    %73 = vector.load %arg2[%c3, %c0_82, %c0_83, %c0_84] : memref<8x2x8x8xf32, #tpu.memory_space<vmem>>, vector<1x1x8x8xf32>
    %74 = vector.shape_cast %73 : vector<1x1x8x8xf32> to vector<8x8xf32>
    %cst_85 = arith.constant dense<0.000000e+00> : vector<8x128xf32>
    %75 = tpu.matmul %74, %72, %cst_85 {dimension_numbers = #tpu.dot_dimension_numbers<[1], [0], [0], [1], [0, 0, 1, 1], [], []>} : vector<8x8xf32>, vector<8x128xf32>, vector<8x128xf32> -> vector<8x128xf32>
    %c0_86 = arith.constant 0 : index
    %c0_87 = arith.constant 0 : index
    %c128_88 = arith.constant 128 : index
    %76 = vector.load %arg5[%c0_86, %c0_87, %c128_88] : memref<1x8x256xf32, #tpu.memory_space<vmem>>, vector<1x8x128xf32>
    %77 = vector.shape_cast %76 : vector<1x8x128xf32> to vector<8x128xf32>
    %c3_89 = arith.constant 3 : index
    %c1_90 = arith.constant 1 : index
    %c0_91 = arith.constant 0 : index
    %c0_92 = arith.constant 0 : index
    %78 = vector.load %arg2[%c3_89, %c1_90, %c0_91, %c0_92] : memref<8x2x8x8xf32, #tpu.memory_space<vmem>>, vector<1x1x8x8xf32>
    %79 = vector.shape_cast %78 : vector<1x1x8x8xf32> to vector<8x8xf32>
    %cst_93 = arith.constant dense<0.000000e+00> : vector<8x128xf32>
    %80 = tpu.matmul %79, %77, %cst_93 {dimension_numbers = #tpu.dot_dimension_numbers<[1], [0], [0], [1], [0, 0, 1, 1], [], []>} : vector<8x8xf32>, vector<8x128xf32>, vector<8x128xf32> -> vector<8x128xf32>
    %81 = arith.addf %75, %80 : vector<8x128xf32>
    %c3_94 = arith.constant 3 : index
    %c0_95 = arith.constant 0 : index
    %c0_96 = arith.constant 0 : index
    %82 = vector.load %arg3[%c3_94, %c0_95, %c0_96] : memref<8x8x1xf32, #tpu.memory_space<vmem>>, vector<1x8x1xf32>
    %83 = vector.shape_cast %82 : vector<1x8x1xf32> to vector<8x1xf32>
    %84 = vector.broadcast %83 : vector<8x1xf32> to vector<8x128xf32>
    %85 = arith.addf %81, %84 : vector<8x128xf32>
    %cst_97 = arith.constant 0.000000e+00 : f32
    %86 = vector.broadcast %cst_97 : f32 to vector<8x128xf32>
    %87 = arith.maximumf %85, %86 : vector<8x128xf32>
    %88 = arith.addf %87, %50 : vector<8x128xf32>
    %cst_98 = arith.constant 0.000000e+00 : f32
    %89 = vector.broadcast %cst_98 : f32 to vector<8x128xf32>
    %90 = arith.maximumf %88, %89 : vector<8x128xf32>
    %c0_99 = arith.constant 0 : index
    %c0_100 = arith.constant 0 : index
    %c128_101 = arith.constant 128 : index
    %91 = vector.load %arg5[%c0_99, %c0_100, %c128_101] : memref<1x8x256xf32, #tpu.memory_space<vmem>>, vector<1x8x128xf32>
    %92 = vector.shape_cast %91 : vector<1x8x128xf32> to vector<8x128xf32>
    %93 = vector.shape_cast %90 : vector<8x128xf32> to vector<1x8x128xf32>
    tpu.vector_store %arg5[%c0_99, %c0_100, %c128_101], %93 {strides = array<i32>} : memref<1x8x256xf32, #tpu.memory_space<vmem>>, vector<1x8x128xf32>,
    %c0_102 = arith.constant 0 : index
    %c0_103 = arith.constant 0 : index
    %c128_104 = arith.constant 128 : index
    %94 = vector.load %arg5[%c0_102, %c0_103, %c128_104] : memref<1x8x256xf32, #tpu.memory_space<vmem>>, vector<1x8x128xf32>
    %95 = vector.shape_cast %94 : vector<1x8x128xf32> to vector<8x128xf32>
    %c0_105 = arith.constant 0 : index
    %c0_106 = arith.constant 0 : index
    %c124 = arith.constant 124 : index
    %96 = vector.load %arg5[%c0_105, %c0_106, %c124] : memref<1x8x256xf32, #tpu.memory_space<vmem>>, vector<1x8x128xf32>
    %97 = vector.shape_cast %96 : vector<1x8x128xf32> to vector<8x128xf32>
    %c4 = arith.constant 4 : index
    %c0_107 = arith.constant 0 : index
    %c0_108 = arith.constant 0 : index
    %c0_109 = arith.constant 0 : index
    %98 = vector.load %arg2[%c4, %c0_107, %c0_108, %c0_109] : memref<8x2x8x8xf32, #tpu.memory_space<vmem>>, vector<1x1x8x8xf32>
    %99 = vector.shape_cast %98 : vector<1x1x8x8xf32> to vector<8x8xf32>
    %cst_110 = arith.constant dense<0.000000e+00> : vector<8x128xf32>
    %100 = tpu.matmul %99, %97, %cst_110 {dimension_numbers = #tpu.dot_dimension_numbers<[1], [0], [0], [1], [0, 0, 1, 1], [], []>} : vector<8x8xf32>, vector<8x128xf32>, vector<8x128xf32> -> vector<8x128xf32>
    %c0_111 = arith.constant 0 : index
    %c0_112 = arith.constant 0 : index
    %c128_113 = arith.constant 128 : index
    %101 = vector.load %arg5[%c0_111, %c0_112, %c128_113] : memref<1x8x256xf32, #tpu.memory_space<vmem>>, vector<1x8x128xf32>
    %102 = vector.shape_cast %101 : vector<1x8x128xf32> to vector<8x128xf32>
    %c4_114 = arith.constant 4 : index
    %c1_115 = arith.constant 1 : index
    %c0_116 = arith.constant 0 : index
    %c0_117 = arith.constant 0 : index
    %103 = vector.load %arg2[%c4_114, %c1_115, %c0_116, %c0_117] : memref<8x2x8x8xf32, #tpu.memory_space<vmem>>, vector<1x1x8x8xf32>
    %104 = vector.shape_cast %103 : vector<1x1x8x8xf32> to vector<8x8xf32>
    %cst_118 = arith.constant dense<0.000000e+00> : vector<8x128xf32>
    %105 = tpu.matmul %104, %102, %cst_118 {dimension_numbers = #tpu.dot_dimension_numbers<[1], [0], [0], [1], [0, 0, 1, 1], [], []>} : vector<8x8xf32>, vector<8x128xf32>, vector<8x128xf32> -> vector<8x128xf32>
    %106 = arith.addf %100, %105 : vector<8x128xf32>
    %c4_119 = arith.constant 4 : index
    %c0_120 = arith.constant 0 : index
    %c0_121 = arith.constant 0 : index
    %107 = vector.load %arg3[%c4_119, %c0_120, %c0_121] : memref<8x8x1xf32, #tpu.memory_space<vmem>>, vector<1x8x1xf32>
    %108 = vector.shape_cast %107 : vector<1x8x1xf32> to vector<8x1xf32>
    %109 = vector.broadcast %108 : vector<8x1xf32> to vector<8x128xf32>
    %110 = arith.addf %106, %109 : vector<8x128xf32>
    %cst_122 = arith.constant 0.000000e+00 : f32
    %111 = vector.broadcast %cst_122 : f32 to vector<8x128xf32>
    %112 = arith.maximumf %110, %111 : vector<8x128xf32>
    %c0_123 = arith.constant 0 : index
    %c0_124 = arith.constant 0 : index
    %c128_125 = arith.constant 128 : index
    %113 = vector.load %arg5[%c0_123, %c0_124, %c128_125] : memref<1x8x256xf32, #tpu.memory_space<vmem>>, vector<1x8x128xf32>
    %114 = vector.shape_cast %113 : vector<1x8x128xf32> to vector<8x128xf32>
    %115 = vector.shape_cast %112 : vector<8x128xf32> to vector<1x8x128xf32>
    tpu.vector_store %arg5[%c0_123, %c0_124, %c128_125], %115 {strides = array<i32>} : memref<1x8x256xf32, #tpu.memory_space<vmem>>, vector<1x8x128xf32>,
    %c0_126 = arith.constant 0 : index
    %c0_127 = arith.constant 0 : index
    %c124_128 = arith.constant 124 : index
    %116 = vector.load %arg5[%c0_126, %c0_127, %c124_128] : memref<1x8x256xf32, #tpu.memory_space<vmem>>, vector<1x8x128xf32>
    %117 = vector.shape_cast %116 : vector<1x8x128xf32> to vector<8x128xf32>
    %c5 = arith.constant 5 : index
    %c0_129 = arith.constant 0 : index
    %c0_130 = arith.constant 0 : index
    %c0_131 = arith.constant 0 : index
    %118 = vector.load %arg2[%c5, %c0_129, %c0_130, %c0_131] : memref<8x2x8x8xf32, #tpu.memory_space<vmem>>, vector<1x1x8x8xf32>
    %119 = vector.shape_cast %118 : vector<1x1x8x8xf32> to vector<8x8xf32>
    %cst_132 = arith.constant dense<0.000000e+00> : vector<8x128xf32>
    %120 = tpu.matmul %119, %117, %cst_132 {dimension_numbers = #tpu.dot_dimension_numbers<[1], [0], [0], [1], [0, 0, 1, 1], [], []>} : vector<8x8xf32>, vector<8x128xf32>, vector<8x128xf32> -> vector<8x128xf32>
    %c0_133 = arith.constant 0 : index
    %c0_134 = arith.constant 0 : index
    %c128_135 = arith.constant 128 : index
    %121 = vector.load %arg5[%c0_133, %c0_134, %c128_135] : memref<1x8x256xf32, #tpu.memory_space<vmem>>, vector<1x8x128xf32>
    %122 = vector.shape_cast %121 : vector<1x8x128xf32> to vector<8x128xf32>
    %c5_136 = arith.constant 5 : index
    %c1_137 = arith.constant 1 : index
    %c0_138 = arith.constant 0 : index
    %c0_139 = arith.constant 0 : index
    %123 = vector.load %arg2[%c5_136, %c1_137, %c0_138, %c0_139] : memref<8x2x8x8xf32, #tpu.memory_space<vmem>>, vector<1x1x8x8xf32>
    %124 = vector.shape_cast %123 : vector<1x1x8x8xf32> to vector<8x8xf32>
    %cst_140 = arith.constant dense<0.000000e+00> : vector<8x128xf32>
    %125 = tpu.matmul %124, %122, %cst_140 {dimension_numbers = #tpu.dot_dimension_numbers<[1], [0], [0], [1], [0, 0, 1, 1], [], []>} : vector<8x8xf32>, vector<8x128xf32>, vector<8x128xf32> -> vector<8x128xf32>
    %126 = arith.addf %120, %125 : vector<8x128xf32>
    %c5_141 = arith.constant 5 : index
    %c0_142 = arith.constant 0 : index
    %c0_143 = arith.constant 0 : index
    %127 = vector.load %arg3[%c5_141, %c0_142, %c0_143] : memref<8x8x1xf32, #tpu.memory_space<vmem>>, vector<1x8x1xf32>
    %128 = vector.shape_cast %127 : vector<1x8x1xf32> to vector<8x1xf32>
    %129 = vector.broadcast %128 : vector<8x1xf32> to vector<8x128xf32>
    %130 = arith.addf %126, %129 : vector<8x128xf32>
    %cst_144 = arith.constant 0.000000e+00 : f32
    %131 = vector.broadcast %cst_144 : f32 to vector<8x128xf32>
    %132 = arith.maximumf %130, %131 : vector<8x128xf32>
    %133 = arith.addf %132, %95 : vector<8x128xf32>
    %cst_145 = arith.constant 0.000000e+00 : f32
    %134 = vector.broadcast %cst_145 : f32 to vector<8x128xf32>
    %135 = arith.maximumf %133, %134 : vector<8x128xf32>
    %c0_146 = arith.constant 0 : index
    %c0_147 = arith.constant 0 : index
    %c128_148 = arith.constant 128 : index
    %136 = vector.load %arg5[%c0_146, %c0_147, %c128_148] : memref<1x8x256xf32, #tpu.memory_space<vmem>>, vector<1x8x128xf32>
    %137 = vector.shape_cast %136 : vector<1x8x128xf32> to vector<8x128xf32>
    %138 = vector.shape_cast %135 : vector<8x128xf32> to vector<1x8x128xf32>
    tpu.vector_store %arg5[%c0_146, %c0_147, %c128_148], %138 {strides = array<i32>} : memref<1x8x256xf32, #tpu.memory_space<vmem>>, vector<1x8x128xf32>,
    %c0_149 = arith.constant 0 : index
    %c0_150 = arith.constant 0 : index
    %c128_151 = arith.constant 128 : index
    %139 = vector.load %arg5[%c0_149, %c0_150, %c128_151] : memref<1x8x256xf32, #tpu.memory_space<vmem>>, vector<1x8x128xf32>
    %140 = vector.shape_cast %139 : vector<1x8x128xf32> to vector<8x128xf32>
    %c0_152 = arith.constant 0 : index
    %c0_153 = arith.constant 0 : index
    %c120 = arith.constant 120 : index
    %141 = vector.load %arg5[%c0_152, %c0_153, %c120] : memref<1x8x256xf32, #tpu.memory_space<vmem>>, vector<1x8x128xf32>
    %142 = vector.shape_cast %141 : vector<1x8x128xf32> to vector<8x128xf32>
    %c6 = arith.constant 6 : index
    %c0_154 = arith.constant 0 : index
    %c0_155 = arith.constant 0 : index
    %c0_156 = arith.constant 0 : index
    %143 = vector.load %arg2[%c6, %c0_154, %c0_155, %c0_156] : memref<8x2x8x8xf32, #tpu.memory_space<vmem>>, vector<1x1x8x8xf32>
    %144 = vector.shape_cast %143 : vector<1x1x8x8xf32> to vector<8x8xf32>
    %cst_157 = arith.constant dense<0.000000e+00> : vector<8x128xf32>
    %145 = tpu.matmul %144, %142, %cst_157 {dimension_numbers = #tpu.dot_dimension_numbers<[1], [0], [0], [1], [0, 0, 1, 1], [], []>} : vector<8x8xf32>, vector<8x128xf32>, vector<8x128xf32> -> vector<8x128xf32>
    %c0_158 = arith.constant 0 : index
    %c0_159 = arith.constant 0 : index
    %c128_160 = arith.constant 128 : index
    %146 = vector.load %arg5[%c0_158, %c0_159, %c128_160] : memref<1x8x256xf32, #tpu.memory_space<vmem>>, vector<1x8x128xf32>
    %147 = vector.shape_cast %146 : vector<1x8x128xf32> to vector<8x128xf32>
    %c6_161 = arith.constant 6 : index
    %c1_162 = arith.constant 1 : index
    %c0_163 = arith.constant 0 : index
    %c0_164 = arith.constant 0 : index
    %148 = vector.load %arg2[%c6_161, %c1_162, %c0_163, %c0_164] : memref<8x2x8x8xf32, #tpu.memory_space<vmem>>, vector<1x1x8x8xf32>
    %149 = vector.shape_cast %148 : vector<1x1x8x8xf32> to vector<8x8xf32>
    %cst_165 = arith.constant dense<0.000000e+00> : vector<8x128xf32>
    %150 = tpu.matmul %149, %147, %cst_165 {dimension_numbers = #tpu.dot_dimension_numbers<[1], [0], [0], [1], [0, 0, 1, 1], [], []>} : vector<8x8xf32>, vector<8x128xf32>, vector<8x128xf32> -> vector<8x128xf32>
    %151 = arith.addf %145, %150 : vector<8x128xf32>
    %c6_166 = arith.constant 6 : index
    %c0_167 = arith.constant 0 : index
    %c0_168 = arith.constant 0 : index
    %152 = vector.load %arg3[%c6_166, %c0_167, %c0_168] : memref<8x8x1xf32, #tpu.memory_space<vmem>>, vector<1x8x1xf32>
    %153 = vector.shape_cast %152 : vector<1x8x1xf32> to vector<8x1xf32>
    %154 = vector.broadcast %153 : vector<8x1xf32> to vector<8x128xf32>
    %155 = arith.addf %151, %154 : vector<8x128xf32>
    %cst_169 = arith.constant 0.000000e+00 : f32
    %156 = vector.broadcast %cst_169 : f32 to vector<8x128xf32>
    %157 = arith.maximumf %155, %156 : vector<8x128xf32>
    %c0_170 = arith.constant 0 : index
    %c0_171 = arith.constant 0 : index
    %c128_172 = arith.constant 128 : index
    %158 = vector.load %arg5[%c0_170, %c0_171, %c128_172] : memref<1x8x256xf32, #tpu.memory_space<vmem>>, vector<1x8x128xf32>
    %159 = vector.shape_cast %158 : vector<1x8x128xf32> to vector<8x128xf32>
    %160 = vector.shape_cast %157 : vector<8x128xf32> to vector<1x8x128xf32>
    tpu.vector_store %arg5[%c0_170, %c0_171, %c128_172], %160 {strides = array<i32>} : memref<1x8x256xf32, #tpu.memory_space<vmem>>, vector<1x8x128xf32>,
    %c0_173 = arith.constant 0 : index
    %c0_174 = arith.constant 0 : index
    %c120_175 = arith.constant 120 : index
    %161 = vector.load %arg5[%c0_173, %c0_174, %c120_175] : memref<1x8x256xf32, #tpu.memory_space<vmem>>, vector<1x8x128xf32>
    %162 = vector.shape_cast %161 : vector<1x8x128xf32> to vector<8x128xf32>
    %c7 = arith.constant 7 : index
    %c0_176 = arith.constant 0 : index
    %c0_177 = arith.constant 0 : index
    %c0_178 = arith.constant 0 : index
    %163 = vector.load %arg2[%c7, %c0_176, %c0_177, %c0_178] : memref<8x2x8x8xf32, #tpu.memory_space<vmem>>, vector<1x1x8x8xf32>
    %164 = vector.shape_cast %163 : vector<1x1x8x8xf32> to vector<8x8xf32>
    %cst_179 = arith.constant dense<0.000000e+00> : vector<8x128xf32>
    %165 = tpu.matmul %164, %162, %cst_179 {dimension_numbers = #tpu.dot_dimension_numbers<[1], [0], [0], [1], [0, 0, 1, 1], [], []>} : vector<8x8xf32>, vector<8x128xf32>, vector<8x128xf32> -> vector<8x128xf32>
    %c0_180 = arith.constant 0 : index
    %c0_181 = arith.constant 0 : index
    %c128_182 = arith.constant 128 : index
    %166 = vector.load %arg5[%c0_180, %c0_181, %c128_182] : memref<1x8x256xf32, #tpu.memory_space<vmem>>, vector<1x8x128xf32>
    %167 = vector.shape_cast %166 : vector<1x8x128xf32> to vector<8x128xf32>
    %c7_183 = arith.constant 7 : index
    %c1_184 = arith.constant 1 : index
    %c0_185 = arith.constant 0 : index
    %c0_186 = arith.constant 0 : index
    %168 = vector.load %arg2[%c7_183, %c1_184, %c0_185, %c0_186] : memref<8x2x8x8xf32, #tpu.memory_space<vmem>>, vector<1x1x8x8xf32>
    %169 = vector.shape_cast %168 : vector<1x1x8x8xf32> to vector<8x8xf32>
    %cst_187 = arith.constant dense<0.000000e+00> : vector<8x128xf32>
    %170 = tpu.matmul %169, %167, %cst_187 {dimension_numbers = #tpu.dot_dimension_numbers<[1], [0], [0], [1], [0, 0, 1, 1], [], []>} : vector<8x8xf32>, vector<8x128xf32>, vector<8x128xf32> -> vector<8x128xf32>
    %171 = arith.addf %165, %170 : vector<8x128xf32>
    %c7_188 = arith.constant 7 : index
    %c0_189 = arith.constant 0 : index
    %c0_190 = arith.constant 0 : index
    %172 = vector.load %arg3[%c7_188, %c0_189, %c0_190] : memref<8x8x1xf32, #tpu.memory_space<vmem>>, vector<1x8x1xf32>
    %173 = vector.shape_cast %172 : vector<1x8x1xf32> to vector<8x1xf32>
    %174 = vector.broadcast %173 : vector<8x1xf32> to vector<8x128xf32>
    %175 = arith.addf %171, %174 : vector<8x128xf32>
    %cst_191 = arith.constant 0.000000e+00 : f32
    %176 = vector.broadcast %cst_191 : f32 to vector<8x128xf32>
    %177 = arith.maximumf %175, %176 : vector<8x128xf32>
    %178 = arith.addf %177, %140 : vector<8x128xf32>
    %cst_192 = arith.constant 0.000000e+00 : f32
    %179 = vector.broadcast %cst_192 : f32 to vector<8x128xf32>
    %180 = arith.maximumf %178, %179 : vector<8x128xf32>
    %c0_193 = arith.constant 0 : index
    %c0_194 = arith.constant 0 : index
    %c0_195 = arith.constant 0 : index
    %181 = vector.load %arg4[%c0_193, %c0_194, %c0_195] : memref<1x8x128xf32, #tpu.memory_space<vmem>>, vector<1x8x128xf32>
    %182 = vector.shape_cast %181 : vector<1x8x128xf32> to vector<8x128xf32>
    %183 = vector.shape_cast %180 : vector<8x128xf32> to vector<1x8x128xf32>
    tpu.vector_store %arg4[%c0_193, %c0_194, %c0_195], %183 {strides = array<i32>} : memref<1x8x128xf32, #tpu.memory_space<vmem>>, vector<1x8x128xf32>,
    return
  }
  func.func @transform_0(%arg0: i32) -> (i32, i32, i32) {
    %c0_i32 = arith.constant 0 : i32
    %c0_i32_0 = arith.constant 0 : i32
    %c0_i32_1 = arith.constant 0 : i32
    return %arg0, %c0_i32, %c0_i32_0 : i32, i32, i32
  }
  func.func @transform_1(%arg0: i32) -> (i32, i32, i32, i32) {
    %c0_i32 = arith.constant 0 : i32
    %c0_i32_0 = arith.constant 0 : i32
    %c0_i32_1 = arith.constant 0 : i32
    %c0_i32_2 = arith.constant 0 : i32
    %c0_i32_3 = arith.constant 0 : i32
    return %c0_i32, %c0_i32_0, %c0_i32_1, %c0_i32_2 : i32, i32, i32, i32
  }
  func.func @transform_2(%arg0: i32) -> (i32, i32, i32) {
    %c0_i32 = arith.constant 0 : i32
    %c0_i32_0 = arith.constant 0 : i32
    %c0_i32_1 = arith.constant 0 : i32
    %c0_i32_2 = arith.constant 0 : i32
    return %c0_i32, %c0_i32_0, %c0_i32_1 : i32, i32, i32
  }
  func.func @transform_3(%arg0: i32) -> (i32, i32, i32) {
    %c0_i32 = arith.constant 0 : i32
    %c0_i32_0 = arith.constant 0 : i32
    %c0_i32_1 = arith.constant 0 : i32
    return %arg0, %c0_i32, %c0_i32_0 : i32, i32, i32
  }
}

</mosaic_0001>

<llo_original>
// kernel: tpu_custom_call.1
$region0: #{tpu_custom_call.1}
  #allocation0 [shape = 'u32[]', space=smem, size = 0x4, offset = 0x4, fixed_abs, tag = 'smem constant byte address 0x4 - core index']
  #allocation1 [shape = 'u32[72,128]{1,0:T(1,128)}', space=vmem, size = 0x9000, scoped, tag = 'internal scratch']
  #allocation2 [shape = 'f32[1,8,256]{2,1,0:T(8,128)}', space=vmem, size = 0x2000, scoped, tag = 'scratch operand']
  %s0 = inlined_call_operand.vmem [shape: f32[2,8,128], index: 0, kind: input, shape index: {}]
  %s1 = inlined_call_operand.hbm [shape: f32[8,2,8,8], index: 1, kind: input, shape index: {}]
  %s2 = inlined_call_operand.vmem [shape: f32[8,8,1], index: 2, kind: input, shape index: {}]
  %s3 = inlined_call_operand.hbm [shape: f32[2,8,128], index: 3, kind: output, shape index: {}]
  %s4 = sld [smem:[#allocation0]]
  $region49: #{tpu_custom_call.1} parent=0
    _
  %s6 = ssub.s32 1, %s4
  %s7 = scalar_select 0, %s6, %s4
  $region1: #{tpu_custom_call.1} parent=0
    #allocation3 [shape = 'u8[65536]{0}', space=vmem, size = 0x10000, scoped, tag = 'input window, operand 1, single buffered']
    #allocation4 [shape = 's32[2]{0}', space=sflag, size = 0x8, scoped, tag = 'scoped memory for tpu_custom_call.1']
    #allocation5 [shape = 's32[2]{0}', space=sflag, size = 0x8, scoped, tag = 'scoped memory for tpu_custom_call.1']
    #allocation6 [shape = 'u8[8192]{0}', space=vmem, size = 0x2000, scoped, tag = 'output window, operand 0']
    %8 = vsyncpa [#allocation4], 0
    %9 = vsyncpa [#allocation5], 0
    %s10 = scalar_lea.sflag [#allocation5], 1
    %11 = vsyncpa %s10, 0
    loop: start=0, step=1, limit=4
    $region2: #{tpu_custom_call.1} parent=1 // loop_pre_header
      _
    $region3: #{tpu_custom_call.1} parent=1 // loop_header
      %s13 = sphi 0, %s17
      %p14 = scmp.ge.s32.totalorder %s13, 4
      %s23 = sphi 0, %s25
      %s26 = sphi 0, %s23
      %s27 = sphi 0, %s26
      %s43 = sphi 0, %s27
      %s47 = sphi 0, %s47
      %s49 = sphi 0, %s47
      %s50 = sphi 0, %s49
      %s64 = sphi 0, %s50
      %s68 = sphi 0, %s68
      %s70 = sphi 0, %s68
      %s71 = sphi 0, %s70
      %s85 = sphi 0, %s71
      %s91 = sphi 0, %s93
      %s94 = sphi 0, %s91
      %s95 = sphi 0, %s94
      %s111 = sphi 0, %s95
    $region4: #{tpu_custom_call.1} parent=1 // loop_header_branch
      %16 = sbr.rel (%p14) target = $region8
    $region5: #{tpu_custom_call.1} parent=1 // loop_body
      %s18 = ssub.s32 %s13, 1
      %s19 = ssub.s32 %s13, 2
      %s20 = sadd.s32 %s13, 1
      %s21 = ssub.s32 %s13, %s20
      %p22 = scmp.eq.s32.totalorder %s21, 0
      %s24 = sadd.s32 %s23, 1
      %s25 = scalar_select %p22, %s23, %s24
      %p28 = pneg %p22
      %p29 = scmp.eq.s32.totalorder %s13, 1
      %p30 = por %p28, %p29
      %p31 = scmp.ne.s32.totalorder %s23, %s26
      %p32 = scmp.eq.s32.totalorder %s13, 0
      %p33 = por %p31, %p32
      %p34 = scmp.ne.s32.totalorder %s23, %s26
      %p35 = scmp.eq.s32.totalorder %s18, 1
      %p36 = por %p34, %p35
      %p37 = scmp.ne.s32.totalorder %s26, %s27
      %p38 = scmp.eq.s32.totalorder %s18, 0
      %p39 = por %p37, %p38
      %p40 = scmp.ne.s32.totalorder %s26, %s27
      %p41 = scmp.eq.s32.totalorder %s19, 1
      %p42 = por %p40, %p41
      %p44 = scmp.ne.s32.totalorder %s27, %s43
      %p45 = scmp.eq.s32.totalorder %s19, 0
      %p46 = por %p44, %p45
      %s48 = sadd.s32 %s47, 1
      %p51 = scmp.eq.s32.totalorder %s13, 1
      %p52 = scmp.ne.s32.totalorder %s47, %s49
      %p53 = scmp.eq.s32.totalorder %s13, 0
      %p54 = por %p52, %p53
      %p55 = scmp.ne.s32.totalorder %s47, %s49
      %p56 = scmp.eq.s32.totalorder %s18, 1
      %p57 = por %p55, %p56
      %p58 = scmp.ne.s32.totalorder %s49, %s50
      %p59 = scmp.eq.s32.totalorder %s18, 0
      %p60 = por %p58, %p59
      %p61 = scmp.ne.s32.totalorder %s49, %s50
      %p62 = scmp.eq.s32.totalorder %s19, 1
      %p63 = por %p61, %p62
      %p65 = scmp.ne.s32.totalorder %s50, %s64
      %p66 = scmp.eq.s32.totalorder %s19, 0
      %p67 = por %p65, %p66
      %s69 = sadd.s32 %s68, 1
      %p72 = scmp.eq.s32.totalorder %s13, 1
      %p73 = scmp.ne.s32.totalorder %s68, %s70
      %p74 = scmp.eq.s32.totalorder %s13, 0
      %p75 = por %p73, %p74
      %p76 = scmp.ne.s32.totalorder %s68, %s70
      %p77 = scmp.eq.s32.totalorder %s18, 1
      %p78 = por %p76, %p77
      %p79 = scmp.ne.s32.totalorder %s70, %s71
      %p80 = scmp.eq.s32.totalorder %s18, 0
      %p81 = por %p79, %p80
      %p82 = scmp.ne.s32.totalorder %s70, %s71
      %p83 = scmp.eq.s32.totalorder %s19, 1
      %p84 = por %p82, %p83
      %p86 = scmp.ne.s32.totalorder %s71, %s85
      %p87 = scmp.eq.s32.totalorder %s19, 0
      %p88 = por %p86, %p87
      %s89 = ssub.s32 %s13, %s20
      %p90 = scmp.eq.s32.totalorder %s89, 0
      %s92 = sadd.s32 %s91, 1
      %s93 = scalar_select %p90, %s91, %s92
      %p96 = pneg %p90
      %p97 = scmp.eq.s32.totalorder %s13, 1
      %p98 = por %p96, %p97
      %p99 = scmp.ne.s32.totalorder %s91, %s94
      %p100 = scmp.eq.s32.totalorder %s13, 0
      %p101 = por %p99, %p100
      %p102 = scmp.ne.s32.totalorder %s91, %s94
      %p103 = scmp.eq.s32.totalorder %s18, 1
      %p104 = por %p102, %p103
      %p105 = scmp.ne.s32.totalorder %s94, %s95
      %p106 = scmp.eq.s32.totalorder %s18, 0
      %p107 = por %p105, %p106
      %p108 = scmp.ne.s32.totalorder %s94, %s95
      %p109 = scmp.eq.s32.totalorder %s19, 1
      %p110 = por %p108, %p109
      %p112 = scmp.ne.s32.totalorder %s95, %s111
      %p113 = scmp.eq.s32.totalorder %s19, 0
      %p114 = por %p112, %p113
      %p115 = scmp.le.s32.totalorder 1, %s13
      %p116 = scmp.lt.s32.totalorder %s13, 3
      %p117 = pnand %p115, %p116
      %p118 = pneg %p117
      // Predicated region
      $region9: #{tpu_custom_call.1} parent=5 // pred_check
        _
      $region10: #{tpu_custom_call.1} parent=5 // pred_check_branch
        %120 = sbr.rel (%p117) target = $region12
      $region11: #{tpu_custom_call.1} parent=5 // pred_region
        %s121 = ssub.s32 %s13, 1
        // Predicated region
        $region13: #{tpu_custom_call.1} parent=11 // pred_check
          %p122 = pneg %p60
        $region14: #{tpu_custom_call.1} parent=11 // pred_check_branch
          %124 = sbr.rel (%p122) target = $region16
        $region15: #{tpu_custom_call.1} parent=11 // pred_region
          %126 = vsyncadd [#allocation4], 0
          %s127 = sshll.u32 %s1, 4
          %s128 = int_to_ptr.hbm [resolvable:$true] %s127
          %s129 = sshll.u32 [#allocation3], 4
          %s130 = int_to_ptr.vmem [resolvable:$true] %s129
          %135 = dma.hbm_to_vmem [thread:$0]  %s128, 2048, %s130, [#allocation4], 128, 128, 8
        $region16: #{tpu_custom_call.1} parent=11 // pred_fallthru
          _
        // Predicated region
        $region17: #{tpu_custom_call.1} parent=11 // pred_check
          %p136 = pneg %p81
        $region18: #{tpu_custom_call.1} parent=11 // pred_check_branch
          %138 = sbr.rel (%p136) target = $region20
        $region19: #{tpu_custom_call.1} parent=11 // pred_region
          _
        $region20: #{tpu_custom_call.1} parent=11 // pred_fallthru
          _
      $region12: #{tpu_custom_call.1} parent=5 // pred_fallthru
        _
      %p139 = scmp.lt.s32.totalorder %s13, 2
      // Predicated region
      $region21: #{tpu_custom_call.1} parent=5 // pred_check
        %p140 = pneg %p139
      $region22: #{tpu_custom_call.1} parent=5 // pred_check_branch
        %142 = sbr.rel (%p140) target = $region24
      $region23: #{tpu_custom_call.1} parent=5 // pred_region
        // Predicated region
        $region25: #{tpu_custom_call.1} parent=23 // pred_check
          %p143 = pneg %p33
        $region26: #{tpu_custom_call.1} parent=23 // pred_check_branch
          %145 = sbr.rel (%p143) target = $region28
        $region27: #{tpu_custom_call.1} parent=23 // pred_region
          %p146 = scmp.lt.s32.totalorder %s13, 1
          %s147 = scalar_select %p146, %s13, 1
          %s148 = smul.addr %s147, 8
          %s149 = scalar_lea.vmem %s0, %s148
        $region28: #{tpu_custom_call.1} parent=23 // pred_fallthru
          _
      $region24: #{tpu_custom_call.1} parent=5 // pred_fallthru
        _
      %p150 = scmp.le.s32.totalorder 1, %s13
      %p151 = scmp.lt.s32.totalorder %s13, 3
      %p152 = pnand %p150, %p151
      %p153 = pneg %p152
      // Predicated region
      $region29: #{tpu_custom_call.1} parent=5 // pred_check
        _
      $region30: #{tpu_custom_call.1} parent=5 // pred_check_branch
        %155 = sbr.rel (%p152) target = $region32
      $region31: #{tpu_custom_call.1} parent=5 // pred_region
        %s156 = ssub.s32 %s13, 1
        // Predicated region
        $region33: #{tpu_custom_call.1} parent=31 // pred_check
          %p157 = pneg %p60
        $region34: #{tpu_custom_call.1} parent=31 // pred_check_branch
          %159 = sbr.rel (%p157) target = $region36
        $region35: #{tpu_custom_call.1} parent=31 // pred_region
          %161 = dma.done [#allocation4], 2048
        $region36: #{tpu_custom_call.1} parent=31 // pred_fallthru
          _
        %p162 = scmp.lt.s32.totalorder %s18, 1
        %s163 = scalar_select %p162, %s18, 1
        %s164 = smul.addr %s163, 8
        %s165 = scalar_lea.vmem %s0, %s164
        %p166 = pneg %p39
        %p167 = pneg %p36
        %p168 = pneg %p60
        %p169 = pneg %p57
        %p170 = pneg %p81
        %p171 = pneg %p78
        %p172 = pneg %p107
        %p173 = pneg %p104
        %s174 = sand.u32 %s94, 1
        %s175 = scalar_lea.sflag [#allocation5], %s174
        %s176 = sand.u32 %s94, 1
        %s177 = smul.addr %s176, 8
        %s178 = scalar_lea.vmem [#allocation6], %s177
        %p179 = scmp.lt.s32.totalorder %s18, 1
        %s180 = scalar_select %p179, %s18, 1
        %s181 = smul.addr %s180, 8
        %s182 = scalar_lea.vmem %s0, %s181
        %183 = vst [vmem:[#allocation2] sm:$0xff] 0.0
        %v184 = vld [vmem:[%s182] sm:$0xff]
        %185 = vst [vmem:[#allocation2 + $0x8] sm:$0xff] %v184
        %v186 = vld [vmem:[#allocation2 + $0x8] sm:$0xff]
        %v187 = vld [vmem:[#allocation2] sm:$0xff]
        %v188 = vld [vmem:[#allocation3] sm:$0xff]
        %s189 = scalar_lea.vmem [#allocation3], 8
        %v190 = vld [vmem:[%s189] sm:$0xff]
        %vm191 = vcmask 64512
        %v193 = vsel %vm191, %v190, 0
        %195 = vmatpush.msra.mxu0 0.0
        %196 = vmatpush.msra.mxu0 0.0
        %197 = vmatpush.msra.mxu0 0.0
        %198 = vmatpush.msra.mxu0 0.0
        %199 = vmatpush.msra.mxu0 0.0
        %200 = vmatpush.msra.mxu0 0.0
        %201 = vmatpush.msra.mxu0 0.0
        %202 = vmatpush.msra.mxu0 0.0
        %203 = vmatpush.msra.mxu0 0.0
        %204 = vmatpush.msra.mxu0 0.0
        %205 = vmatpush.msra.mxu0 0.0
        %206 = vmatpush.msra.mxu0 0.0
        %207 = vmatpush.msra.mxu0 0.0
        %208 = vmatpush.msra.mxu0 0.0
        %209 = vmatpush.msra.mxu0 0.0
        %210 = vmatpush.msra.mxu0 %v186
        %211 = vmatmul.f32.gmra.mxu0 %v193
        %v212 = vpop.f32.mrf.mxu0
        %v213 = vadd.f32 0.0, %v212
        %214 = vdwg.mxu0
        %217 = vrot.lane.b32.xlu0 %v187, 1
        %v218 = vpop.permute.xlu0 %217
        %219 = vrot.lane.b32.xlu0 %v186, 1
        %v220 = vpop.permute.xlu0 %219
        %vm221 = vcmask 7168
        %v222 = vsel %vm221, %v218, %v220
        %v225 = vsel %vm191, %v188, 0
        %227 = vmatpush.msra.mxu0 0.0
        %228 = vmatpush.msra.mxu0 0.0
        %229 = vmatpush.msra.mxu0 0.0
        %230 = vmatpush.msra.mxu0 0.0
        %231 = vmatpush.msra.mxu0 0.0
        %232 = vmatpush.msra.mxu0 0.0
        %233 = vmatpush.msra.mxu0 0.0
        %234 = vmatpush.msra.mxu0 0.0
        %235 = vmatpush.msra.mxu0 0.0
        %236 = vmatpush.msra.mxu0 0.0
        %237 = vmatpush.msra.mxu0 0.0
        %238 = vmatpush.msra.mxu0 0.0
        %239 = vmatpush.msra.mxu0 0.0
        %240 = vmatpush.msra.mxu0 0.0
        %241 = vmatpush.msra.mxu0 0.0
        %242 = vmatpush.msra.mxu0 %v222
        %243 = vmatmul.f32.gmra.mxu0 %v225
        %v244 = vpop.f32.mrf.mxu0
        %v245 = vadd.f32 %v213, %v244
        %246 = vdwg.mxu0
        %v247 = vld [vmem:[%s2] sm:$0xff]
        %249 = vset.pattern.permute.xlu0 0
        %250 = vperm.xlu0 %249, %v247
        %v251 = vpop.permute.xlu0 %250
        %v253 = vadd.f32 %v245, %v251
        %v254 = vmax.f32 %v253, 0.0
        %255 = vst [vmem:[#allocation2 + $0x8] sm:$0xff] %v254
        %v256 = vld [vmem:[#allocation2] sm:$0xff]
        %v257 = vld [vmem:[#allocation2 + $0x8] sm:$0xff]
        %s258 = scalar_lea.vmem [#allocation3], 16
        %v259 = vld [vmem:[%s258] sm:$0xff]
        %s260 = scalar_lea.vmem [#allocation3], 24
        %v261 = vld [vmem:[%s260] sm:$0xff]
        %v263 = vsel %vm191, %v261, 0
        %265 = vmatpush.msra.mxu0 0.0
        %266 = vmatpush.msra.mxu0 0.0
        %267 = vmatpush.msra.mxu0 0.0
        %268 = vmatpush.msra.mxu0 0.0
        %269 = vmatpush.msra.mxu0 0.0
        %270 = vmatpush.msra.mxu0 0.0
        %271 = vmatpush.msra.mxu0 0.0
        %272 = vmatpush.msra.mxu0 0.0
        %273 = vmatpush.msra.mxu0 0.0
        %274 = vmatpush.msra.mxu0 0.0
        %275 = vmatpush.msra.mxu0 0.0
        %276 = vmatpush.msra.mxu0 0.0
        %277 = vmatpush.msra.mxu0 0.0
        %278 = vmatpush.msra.mxu0 0.0
        %279 = vmatpush.msra.mxu0 0.0
        %280 = vmatpush.msra.mxu0 %v257
        %281 = vmatmul.f32.gmra.mxu0 %v263
        %v282 = vpop.f32.mrf.mxu0
        %v283 = vadd.f32 0.0, %v282
        %284 = vdwg.mxu0
        %287 = vrot.lane.b32.xlu0 %v256, 1
        %v288 = vpop.permute.xlu0 %287
        %289 = vrot.lane.b32.xlu0 %v257, 1
        %v290 = vpop.permute.xlu0 %289
        %v291 = vsel %vm221, %v288, %v290
        %v294 = vsel %vm191, %v259, 0
        %296 = vmatpush.msra.mxu0 0.0
        %297 = vmatpush.msra.mxu0 0.0
        %298 = vmatpush.msra.mxu0 0.0
        %299 = vmatpush.msra.mxu0 0.0
        %300 = vmatpush.msra.mxu0 0.0
        %301 = vmatpush.msra.mxu0 0.0
        %302 = vmatpush.msra.mxu0 0.0
        %303 = vmatpush.msra.mxu0 0.0
        %304 = vmatpush.msra.mxu0 0.0
        %305 = vmatpush.msra.mxu0 0.0
        %306 = vmatpush.msra.mxu0 0.0
        %307 = vmatpush.msra.mxu0 0.0
        %308 = vmatpush.msra.mxu0 0.0
        %309 = vmatpush.msra.mxu0 0.0
        %310 = vmatpush.msra.mxu0 0.0
        %311 = vmatpush.msra.mxu0 %v291
        %312 = vmatmul.f32.gmra.mxu0 %v294
        %v313 = vpop.f32.mrf.mxu0
        %v314 = vadd.f32 %v283, %v313
        %315 = vdwg.mxu0
        %s316 = scalar_lea.vmem %s2, 8
        %v317 = vld [vmem:[%s316] sm:$0xff]
        %319 = vset.pattern.permute.xlu0 0
        %320 = vperm.xlu0 %319, %v317
        %v321 = vpop.permute.xlu0 %320
        %v323 = vadd.f32 %v314, %v321
        %v324 = vmax.f32 %v323, 0.0
        %v325 = vadd.f32 %v324, %v186
        %v326 = vmax.f32 %v325, 0.0
        %327 = vst [vmem:[#allocation2 + $0x8] sm:$0xff] %v326
        %v328 = vld [vmem:[#allocation2 + $0x8] sm:$0xff]
        %v329 = vld [vmem:[#allocation2] sm:$0xff]
        %s330 = scalar_lea.vmem [#allocation3], 32
        %v331 = vld [vmem:[%s330] sm:$0xff]
        %s332 = scalar_lea.vmem [#allocation3], 40
        %v333 = vld [vmem:[%s332] sm:$0xff]
        %v335 = vsel %vm191, %v333, 0
        %337 = vmatpush.msra.mxu0 0.0
        %338 = vmatpush.msra.mxu0 0.0
        %339 = vmatpush.msra.mxu0 0.0
        %340 = vmatpush.msra.mxu0 0.0
        %341 = vmatpush.msra.mxu0 0.0
        %342 = vmatpush.msra.mxu0 0.0
        %343 = vmatpush.msra.mxu0 0.0
        %344 = vmatpush.msra.mxu0 0.0
        %345 = vmatpush.msra.mxu0 0.0
        %346 = vmatpush.msra.mxu0 0.0
        %347 = vmatpush.msra.mxu0 0.0
        %348 = vmatpush.msra.mxu0 0.0
        %349 = vmatpush.msra.mxu0 0.0
        %350 = vmatpush.msra.mxu0 0.0
        %351 = vmatpush.msra.mxu0 0.0
        %352 = vmatpush.msra.mxu0 %v328
        %353 = vmatmul.f32.gmra.mxu0 %v335
        %v354 = vpop.f32.mrf.mxu0
        %v355 = vadd.f32 0.0, %v354
        %356 = vdwg.mxu0
        %359 = vrot.lane.b32.xlu0 %v329, 2
        %v360 = vpop.permute.xlu0 %359
        %361 = vrot.lane.b32.xlu0 %v328, 2
        %v362 = vpop.permute.xlu0 %361
        %vm363 = vcmask 15360
        %v364 = vsel %vm363, %v360, %v362
        %v367 = vsel %vm191, %v331, 0
        %369 = vmatpush.msra.mxu0 0.0
        %370 = vmatpush.msra.mxu0 0.0
        %371 = vmatpush.msra.mxu0 0.0
        %372 = vmatpush.msra.mxu0 0.0
        %373 = vmatpush.msra.mxu0 0.0
        %374 = vmatpush.msra.mxu0 0.0
        %375 = vmatpush.msra.mxu0 0.0
        %376 = vmatpush.msra.mxu0 0.0
        %377 = vmatpush.msra.mxu0 0.0
        %378 = vmatpush.msra.mxu0 0.0
        %379 = vmatpush.msra.mxu0 0.0
        %380 = vmatpush.msra.mxu0 0.0
        %381 = vmatpush.msra.mxu0 0.0
        %382 = vmatpush.msra.mxu0 0.0
        %383 = vmatpush.msra.mxu0 0.0
        %384 = vmatpush.msra.mxu0 %v364
        %385 = vmatmul.f32.gmra.mxu0 %v367
        %v386 = vpop.f32.mrf.mxu0
        %v387 = vadd.f32 %v355, %v386
        %388 = vdwg.mxu0
        %s389 = scalar_lea.vmem %s2, 16
        %v390 = vld [vmem:[%s389] sm:$0xff]
        %392 = vset.pattern.permute.xlu0 0
        %393 = vperm.xlu0 %392, %v390
        %v394 = vpop.permute.xlu0 %393
        %v396 = vadd.f32 %v387, %v394
        %v397 = vmax.f32 %v396, 0.0
        %398 = vst [vmem:[#allocation2 + $0x8] sm:$0xff] %v397
        %v399 = vld [vmem:[#allocation2] sm:$0xff]
        %v400 = vld [vmem:[#allocation2 + $0x8] sm:$0xff]
        %s401 = scalar_lea.vmem [#allocation3], 48
        %v402 = vld [vmem:[%s401] sm:$0xff]
        %s403 = scalar_lea.vmem [#allocation3], 56
        %v404 = vld [vmem:[%s403] sm:$0xff]
        %v406 = vsel %vm191, %v404, 0
        %408 = vmatpush.msra.mxu0 0.0
        %409 = vmatpush.msra.mxu0 0.0
        %410 = vmatpush.msra.mxu0 0.0
        %411 = vmatpush.msra.mxu0 0.0
        %412 = vmatpush.msra.mxu0 0.0
        %413 = vmatpush.msra.mxu0 0.0
        %414 = vmatpush.msra.mxu0 0.0
        %415 = vmatpush.msra.mxu0 0.0
        %416 = vmatpush.msra.mxu0 0.0
        %417 = vmatpush.msra.mxu0 0.0
        %418 = vmatpush.msra.mxu0 0.0
        %419 = vmatpush.msra.mxu0 0.0
        %420 = vmatpush.msra.mxu0 0.0
        %421 = vmatpush.msra.mxu0 0.0
        %422 = vmatpush.msra.mxu0 0.0
        %423 = vmatpush.msra.mxu0 %v400
        %424 = vmatmul.f32.gmra.mxu0 %v406
        %v425 = vpop.f32.mrf.mxu0
        %v426 = vadd.f32 0.0, %v425
        %427 = vdwg.mxu0
        %430 = vrot.lane.b32.xlu0 %v399, 2
        %v431 = vpop.permute.xlu0 %430
        %432 = vrot.lane.b32.xlu0 %v400, 2
        %v433 = vpop.permute.xlu0 %432
        %v434 = vsel %vm363, %v431, %v433
        %v437 = vsel %vm191, %v402, 0
        %439 = vmatpush.msra.mxu0 0.0
        %440 = vmatpush.msra.mxu0 0.0
        %441 = vmatpush.msra.mxu0 0.0
        %442 = vmatpush.msra.mxu0 0.0
        %443 = vmatpush.msra.mxu0 0.0
        %444 = vmatpush.msra.mxu0 0.0
        %445 = vmatpush.msra.mxu0 0.0
        %446 = vmatpush.msra.mxu0 0.0
        %447 = vmatpush.msra.mxu0 0.0
        %448 = vmatpush.msra.mxu0 0.0
        %449 = vmatpush.msra.mxu0 0.0
        %450 = vmatpush.msra.mxu0 0.0
        %451 = vmatpush.msra.mxu0 0.0
        %452 = vmatpush.msra.mxu0 0.0
        %453 = vmatpush.msra.mxu0 0.0
        %454 = vmatpush.msra.mxu0 %v434
        %455 = vmatmul.f32.gmra.mxu0 %v437
        %v456 = vpop.f32.mrf.mxu0
        %v457 = vadd.f32 %v426, %v456
        %458 = vdwg.mxu0
        %s459 = scalar_lea.vmem %s2, 24
        %v460 = vld [vmem:[%s459] sm:$0xff]
        %462 = vset.pattern.permute.xlu0 0
        %463 = vperm.xlu0 %462, %v460
        %v464 = vpop.permute.xlu0 %463
        %v466 = vadd.f32 %v457, %v464
        %v467 = vmax.f32 %v466, 0.0
        %v468 = vadd.f32 %v467, %v328
        %v469 = vmax.f32 %v468, 0.0
        %470 = vst [vmem:[#allocation2 + $0x8] sm:$0xff] %v469
        %v471 = vld [vmem:[#allocation2 + $0x8] sm:$0xff]
        %v472 = vld [vmem:[#allocation2] sm:$0xff]
        %s473 = scalar_lea.vmem [#allocation3], 64
        %v474 = vld [vmem:[%s473] sm:$0xff]
        %s475 = scalar_lea.vmem [#allocation3], 72
        %v476 = vld [vmem:[%s475] sm:$0xff]
        %v478 = vsel %vm191, %v476, 0
        %480 = vmatpush.msra.mxu0 0.0
        %481 = vmatpush.msra.mxu0 0.0
        %482 = vmatpush.msra.mxu0 0.0
        %483 = vmatpush.msra.mxu0 0.0
        %484 = vmatpush.msra.mxu0 0.0
        %485 = vmatpush.msra.mxu0 0.0
        %486 = vmatpush.msra.mxu0 0.0
        %487 = vmatpush.msra.mxu0 0.0
        %488 = vmatpush.msra.mxu0 0.0
        %489 = vmatpush.msra.mxu0 0.0
        %490 = vmatpush.msra.mxu0 0.0
        %491 = vmatpush.msra.mxu0 0.0
        %492 = vmatpush.msra.mxu0 0.0
        %493 = vmatpush.msra.mxu0 0.0
        %494 = vmatpush.msra.mxu0 0.0
        %495 = vmatpush.msra.mxu0 %v471
        %496 = vmatmul.f32.gmra.mxu0 %v478
        %v497 = vpop.f32.mrf.mxu0
        %v498 = vadd.f32 0.0, %v497
        %499 = vdwg.mxu0
        %502 = vrot.lane.b32.xlu0 %v472, 4
        %v503 = vpop.permute.xlu0 %502
        %504 = vrot.lane.b32.xlu0 %v471, 4
        %v505 = vpop.permute.xlu0 %504
        %vm506 = vcmask 31744
        %v507 = vsel %vm506, %v503, %v505
        %v510 = vsel %vm191, %v474, 0
        %512 = vmatpush.msra.mxu0 0.0
        %513 = vmatpush.msra.mxu0 0.0
        %514 = vmatpush.msra.mxu0 0.0
        %515 = vmatpush.msra.mxu0 0.0
        %516 = vmatpush.msra.mxu0 0.0
        %517 = vmatpush.msra.mxu0 0.0
        %518 = vmatpush.msra.mxu0 0.0
        %519 = vmatpush.msra.mxu0 0.0
        %520 = vmatpush.msra.mxu0 0.0
        %521 = vmatpush.msra.mxu0 0.0
        %522 = vmatpush.msra.mxu0 0.0
        %523 = vmatpush.msra.mxu0 0.0
        %524 = vmatpush.msra.mxu0 0.0
        %525 = vmatpush.msra.mxu0 0.0
        %526 = vmatpush.msra.mxu0 0.0
        %527 = vmatpush.msra.mxu0 %v507
        %528 = vmatmul.f32.gmra.mxu0 %v510
        %v529 = vpop.f32.mrf.mxu0
        %v530 = vadd.f32 %v498, %v529
        %531 = vdwg.mxu0
        %s532 = scalar_lea.vmem %s2, 32
        %v533 = vld [vmem:[%s532] sm:$0xff]
        %535 = vset.pattern.permute.xlu0 0
        %536 = vperm.xlu0 %535, %v533
        %v537 = vpop.permute.xlu0 %536
        %v539 = vadd.f32 %v530, %v537
        %v540 = vmax.f32 %v539, 0.0
        %541 = vst [vmem:[#allocation2 + $0x8] sm:$0xff] %v540
        %v542 = vld [vmem:[#allocation2] sm:$0xff]
        %v543 = vld [vmem:[#allocation2 + $0x8] sm:$0xff]
        %s544 = scalar_lea.vmem [#allocation3], 80
        %v545 = vld [vmem:[%s544] sm:$0xff]
        %s546 = scalar_lea.vmem [#allocation3], 88
        %v547 = vld [vmem:[%s546] sm:$0xff]
        %v549 = vsel %vm191, %v547, 0
        %551 = vmatpush.msra.mxu0 0.0
        %552 = vmatpush.msra.mxu0 0.0
        %553 = vmatpush.msra.mxu0 0.0
        %554 = vmatpush.msra.mxu0 0.0
        %555 = vmatpush.msra.mxu0 0.0
        %556 = vmatpush.msra.mxu0 0.0
        %557 = vmatpush.msra.mxu0 0.0
        %558 = vmatpush.msra.mxu0 0.0
        %559 = vmatpush.msra.mxu0 0.0
        %560 = vmatpush.msra.mxu0 0.0
        %561 = vmatpush.msra.mxu0 0.0
        %562 = vmatpush.msra.mxu0 0.0
        %563 = vmatpush.msra.mxu0 0.0
        %564 = vmatpush.msra.mxu0 0.0
        %565 = vmatpush.msra.mxu0 0.0
        %566 = vmatpush.msra.mxu0 %v543
        %567 = vmatmul.f32.gmra.mxu0 %v549
        %v568 = vpop.f32.mrf.mxu0
        %v569 = vadd.f32 0.0, %v568
        %570 = vdwg.mxu0
        %573 = vrot.lane.b32.xlu0 %v542, 4
        %v574 = vpop.permute.xlu0 %573
        %575 = vrot.lane.b32.xlu0 %v543, 4
        %v576 = vpop.permute.xlu0 %575
        %v577 = vsel %vm506, %v574, %v576
        %v580 = vsel %vm191, %v545, 0
        %582 = vmatpush.msra.mxu0 0.0
        %583 = vmatpush.msra.mxu0 0.0
        %584 = vmatpush.msra.mxu0 0.0
        %585 = vmatpush.msra.mxu0 0.0
        %586 = vmatpush.msra.mxu0 0.0
        %587 = vmatpush.msra.mxu0 0.0
        %588 = vmatpush.msra.mxu0 0.0
        %589 = vmatpush.msra.mxu0 0.0
        %590 = vmatpush.msra.mxu0 0.0
        %591 = vmatpush.msra.mxu0 0.0
        %592 = vmatpush.msra.mxu0 0.0
        %593 = vmatpush.msra.mxu0 0.0
        %594 = vmatpush.msra.mxu0 0.0
        %595 = vmatpush.msra.mxu0 0.0
        %596 = vmatpush.msra.mxu0 0.0
        %597 = vmatpush.msra.mxu0 %v577
        %598 = vmatmul.f32.gmra.mxu0 %v580
        %v599 = vpop.f32.mrf.mxu0
        %v600 = vadd.f32 %v569, %v599
        %601 = vdwg.mxu0
        %s602 = scalar_lea.vmem %s2, 40
        %v603 = vld [vmem:[%s602] sm:$0xff]
        %605 = vset.pattern.permute.xlu0 0
        %606 = vperm.xlu0 %605, %v603
        %v607 = vpop.permute.xlu0 %606
        %v609 = vadd.f32 %v600, %v607
        %v610 = vmax.f32 %v609, 0.0
        %v611 = vadd.f32 %v610, %v471
        %v612 = vmax.f32 %v611, 0.0
        %613 = vst [vmem:[#allocation2 + $0x8] sm:$0xff] %v612
        %v614 = vld [vmem:[#allocation2 + $0x8] sm:$0xff]
        %v615 = vld [vmem:[#allocation2] sm:$0xff]
        %s616 = scalar_lea.vmem [#allocation3], 96
        %v617 = vld [vmem:[%s616] sm:$0xff]
        %s618 = scalar_lea.vmem [#allocation3], 104
        %v619 = vld [vmem:[%s618] sm:$0xff]
        %v621 = vsel %vm191, %v619, 0
        %623 = vmatpush.msra.mxu0 0.0
        %624 = vmatpush.msra.mxu0 0.0
        %625 = vmatpush.msra.mxu0 0.0
        %626 = vmatpush.msra.mxu0 0.0
        %627 = vmatpush.msra.mxu0 0.0
        %628 = vmatpush.msra.mxu0 0.0
        %629 = vmatpush.msra.mxu0 0.0
        %630 = vmatpush.msra.mxu0 0.0
        %631 = vmatpush.msra.mxu0 0.0
        %632 = vmatpush.msra.mxu0 0.0
        %633 = vmatpush.msra.mxu0 0.0
        %634 = vmatpush.msra.mxu0 0.0
        %635 = vmatpush.msra.mxu0 0.0
        %636 = vmatpush.msra.mxu0 0.0
        %637 = vmatpush.msra.mxu0 0.0
        %638 = vmatpush.msra.mxu0 %v614
        %639 = vmatmul.f32.gmra.mxu0 %v621
        %v640 = vpop.f32.mrf.mxu0
        %v641 = vadd.f32 0.0, %v640
        %642 = vdwg.mxu0
        %645 = vrot.lane.b32.xlu0 %v615, 8
        %v646 = vpop.permute.xlu0 %645
        %647 = vrot.lane.b32.xlu0 %v614, 8
        %v648 = vpop.permute.xlu0 %647
        %v649 = vsel %vm191, %v646, %v648
        %v652 = vsel %vm191, %v617, 0
        %654 = vmatpush.msra.mxu0 0.0
        %655 = vmatpush.msra.mxu0 0.0
        %656 = vmatpush.msra.mxu0 0.0
        %657 = vmatpush.msra.mxu0 0.0
        %658 = vmatpush.msra.mxu0 0.0
        %659 = vmatpush.msra.mxu0 0.0
        %660 = vmatpush.msra.mxu0 0.0
        %661 = vmatpush.msra.mxu0 0.0
        %662 = vmatpush.msra.mxu0 0.0
        %663 = vmatpush.msra.mxu0 0.0
        %664 = vmatpush.msra.mxu0 0.0
        %665 = vmatpush.msra.mxu0 0.0
        %666 = vmatpush.msra.mxu0 0.0
        %667 = vmatpush.msra.mxu0 0.0
        %668 = vmatpush.msra.mxu0 0.0
        %669 = vmatpush.msra.mxu0 %v649
        %670 = vmatmul.f32.gmra.mxu0 %v652
        %v671 = vpop.f32.mrf.mxu0
        %v672 = vadd.f32 %v641, %v671
        %673 = vdwg.mxu0
        %s674 = scalar_lea.vmem %s2, 48
        %v675 = vld [vmem:[%s674] sm:$0xff]
        %677 = vset.pattern.permute.xlu0 0
        %678 = vperm.xlu0 %677, %v675
        %v679 = vpop.permute.xlu0 %678
        %v681 = vadd.f32 %v672, %v679
        %v682 = vmax.f32 %v681, 0.0
        %683 = vst [vmem:[#allocation2 + $0x8] sm:$0xff] %v682
        %v684 = vld [vmem:[#allocation2] sm:$0xff]
        %v685 = vld [vmem:[#allocation2 + $0x8] sm:$0xff]
        %s686 = scalar_lea.vmem [#allocation3], 112
        %v687 = vld [vmem:[%s686] sm:$0xff]
        %s688 = scalar_lea.vmem [#allocation3], 120
        %v689 = vld [vmem:[%s688] sm:$0xff]
        %v691 = vsel %vm191, %v689, 0
        %693 = vmatpush.msra.mxu0 0.0
        %694 = vmatpush.msra.mxu0 0.0
        %695 = vmatpush.msra.mxu0 0.0
        %696 = vmatpush.msra.mxu0 0.0
        %697 = vmatpush.msra.mxu0 0.0
        %698 = vmatpush.msra.mxu0 0.0
        %699 = vmatpush.msra.mxu0 0.0
        %700 = vmatpush.msra.mxu0 0.0
        %701 = vmatpush.msra.mxu0 0.0
        %702 = vmatpush.msra.mxu0 0.0
        %703 = vmatpush.msra.mxu0 0.0
        %704 = vmatpush.msra.mxu0 0.0
        %705 = vmatpush.msra.mxu0 0.0
        %706 = vmatpush.msra.mxu0 0.0
        %707 = vmatpush.msra.mxu0 0.0
        %708 = vmatpush.msra.mxu0 %v685
        %709 = vmatmul.f32.gmra.mxu0 %v691
        %v710 = vpop.f32.mrf.mxu0
        %v711 = vadd.f32 0.0, %v710
        %712 = vdwg.mxu0
        %715 = vrot.lane.b32.xlu0 %v684, 8
        %v716 = vpop.permute.xlu0 %715
        %717 = vrot.lane.b32.xlu0 %v685, 8
        %v718 = vpop.permute.xlu0 %717
        %v719 = vsel %vm191, %v716, %v718
        %v722 = vsel %vm191, %v687, 0
        %724 = vmatpush.msra.mxu0 0.0
        %725 = vmatpush.msra.mxu0 0.0
        %726 = vmatpush.msra.mxu0 0.0
        %727 = vmatpush.msra.mxu0 0.0
        %728 = vmatpush.msra.mxu0 0.0
        %729 = vmatpush.msra.mxu0 0.0
        %730 = vmatpush.msra.mxu0 0.0
        %731 = vmatpush.msra.mxu0 0.0
        %732 = vmatpush.msra.mxu0 0.0
        %733 = vmatpush.msra.mxu0 0.0
        %734 = vmatpush.msra.mxu0 0.0
        %735 = vmatpush.msra.mxu0 0.0
        %736 = vmatpush.msra.mxu0 0.0
        %737 = vmatpush.msra.mxu0 0.0
        %738 = vmatpush.msra.mxu0 0.0
        %739 = vmatpush.msra.mxu0 %v719
        %740 = vmatmul.f32.gmra.mxu0 %v722
        %v741 = vpop.f32.mrf.mxu0
        %v742 = vadd.f32 %v711, %v741
        %743 = vdwg.mxu0
        %s744 = scalar_lea.vmem %s2, 56
        %v745 = vld [vmem:[%s744] sm:$0xff]
        %747 = vset.pattern.permute.xlu0 0
        %748 = vperm.xlu0 %747, %v745
        %v749 = vpop.permute.xlu0 %748
        %v751 = vadd.f32 %v742, %v749
        %v752 = vmax.f32 %v751, 0.0
        %v753 = vadd.f32 %v752, %v614
        %v754 = vmax.f32 %v753, 0.0
        %755 = vst [vmem:[%s178] sm:$0xff] %v754
        %s756 = sand.u32 %s94, 1
        %s757 = scalar_lea.sflag [#allocation5], %s756
        %s758 = sand.u32 %s94, 1
        %s759 = smul.addr %s758, 8
        %s760 = scalar_lea.vmem [#allocation6], %s759
        // Predicated region
        $region37: #{tpu_custom_call.1} parent=31 // pred_check
          %p761 = pneg %p104
        $region38: #{tpu_custom_call.1} parent=31 // pred_check_branch
          %763 = sbr.rel (%p761) target = $region40
        $region39: #{tpu_custom_call.1} parent=31 // pred_region
          %765 = vsyncadd %s757, 0
          %s766 = smul.addr %s18, 8
          %s767 = scalar_lea.hbm %s3, %s766
          %s769 = sshll.u32 %s760, 4
          %s770 = int_to_ptr.vmem [resolvable:$true] %s769
          %s771 = sshll.u32 %s767, 4
          %s772 = int_to_ptr.hbm [resolvable:$true] %s771
          %774 = dma.vmem_to_hbm [thread:$0]  %s770, 128, %s772, %s757
        $region40: #{tpu_custom_call.1} parent=31 // pred_fallthru
          _
      $region32: #{tpu_custom_call.1} parent=5 // pred_fallthru
        _
      %p775 = scmp.le.s32.totalorder 2, %s13
      // Predicated region
      $region41: #{tpu_custom_call.1} parent=5 // pred_check
        %p776 = pneg %p775
      $region42: #{tpu_custom_call.1} parent=5 // pred_check_branch
        %778 = sbr.rel (%p776) target = $region44
      $region43: #{tpu_custom_call.1} parent=5 // pred_region
        %s779 = ssub.s32 %s13, 2
        // Predicated region
        $region45: #{tpu_custom_call.1} parent=43 // pred_check
          %p780 = pneg %p110
        $region46: #{tpu_custom_call.1} parent=43 // pred_check_branch
          %782 = sbr.rel (%p780) target = $region48
        $region47: #{tpu_custom_call.1} parent=43 // pred_region
          %s783 = sand.u32 %s95, 1
          %s784 = scalar_lea.sflag [#allocation5], %s783
          %s785 = sand.u32 %s95, 1
          %s786 = smul.addr %s785, 8
          %s787 = scalar_lea.vmem [#allocation6], %s786
          %789 = dma.done %s784, 128
        $region48: #{tpu_custom_call.1} parent=43 // pred_fallthru
          _
      $region44: #{tpu_custom_call.1} parent=5 // pred_fallthru
        _
    $region6: #{tpu_custom_call.1} parent=1 // loop_footer
      %s17 = sadd.s32 1, %s13
    $region7: #{tpu_custom_call.1} parent=1 // loop_footer_branch
      %12 = sbr.rel target = $region3
    $region8: #{tpu_custom_call.1} parent=1 // loop_exit
      _
    %790 = vsyncpa [#allocation4], 1
    %s791 = scalar_lea.sflag [#allocation4], 1
    %792 = vsyncpa %s791, 1
    %793 = vsyncpa [#allocation5], 1
    %s794 = scalar_lea.sflag [#allocation5], 1
    %795 = vsyncpa %s794, 1

</llo_original>
